<compile_context>
chip_gen: v7x
topology: tpu7x:2x2x1
jax: 0.10.0
libtpu: 0.0.40
codegen_flags: <defaults>
</compile_context>

<pallas_src>
import jax
import jax.numpy as jnp
from jax import lax
from jax.experimental import pallas as pl
from jax.experimental.pallas import tpu as pltpu


def _hardswish(x):
    # nn.Hardswish: x * relu6(x + 3) / 6
    return x * jnp.clip(x + 3.0, 0.0, 6.0) * (1.0 / 6.0)


def _matmul_cf(w, x):
    """(Co, K) @ (K, HW) -> (Co, HW) in f32.

    For tiny contractions (K <= 8, the ShuffleV2 toy config) an unrolled VPU
    outer-product FMA avoids MXU push/pop latency; otherwise use the MXU with an
    f32 accumulator.
    """
    K = w.shape[1]
    if K <= 8:
        wf = w.astype(jnp.float32)
        xf = x.astype(jnp.float32)
        acc = wf[:, 0:1] * xf[0:1, :]
        for i in range(1, K):
            acc = acc + wf[:, i:i + 1] * xf[i:i + 1, :]
        return acc
    return jnp.dot(w, x, preferred_element_type=jnp.float32)


def _make_kernel(H, W, perm, l_channels):
    """Build the per-batch-element kernel (statics captured by closure)."""
    HW = H * W

    def kernel(x_l_ref, x_r_ref, w1_ref, b1_ref, wdw_ref, bdw_ref,
               w2_ref, b2_ref, mask_ref, out_ref):
        # x_l_ref : (1, l,  HW)  left (pass-through) channels
        # x_r_ref : (1, Cr, HW)  right channels
        # w1_ref  : (Cor, Cr)    1x1 conv weight, BN scale folded in
        # wdw_ref : (Cor, 9)     3x3 depthwise weight (col = ky*3+kx), BN folded
        # w2_ref  : (Cor, Cor)   1x1 conv weight, BN scale folded in
        # b*_ref  : (Cor, 1)     BN biases (f32)
        # mask_ref: (9, HW)      0/1 boundary masks per tap (f32)
        # out_ref : (1, Ctot, HW) post-shuffle output

        # ---- conv_r1: 1x1 conv (channel contraction) + bias + hardswish ----
        y = _matmul_cf(w1_ref[...], x_r_ref[0])            # (Cor, HW) f32
        y = _hardswish(y + b1_ref[...])

        # ---- dwconv_r.dconv: depthwise 3x3, pad=1, stride=1, BN, no act ----
        # Taps via lane rolls of the flattened spatial axis + boundary masks.
        acc = y * wdw_ref[:, 4:5]                          # centre tap (dy=dx=0)
        for dy in (-1, 0, 1):
            for dx in (-1, 0, 1):
                if dy == 0 and dx == 0:
                    continue
                t = (dy + 1) * 3 + (dx + 1)
                shift = (-(dy * W + dx)) % HW              # tap[i] = y[i + dy*W + dx]
                tap = pltpu.roll(y, shift=shift, axis=1)
                acc = acc + (tap * mask_ref[t:t + 1, :]) * wdw_ref[:, t:t + 1]
        acc = acc + bdw_ref[...]                           # BN only (no_depth_act)

        # ---- dwconv_r.pconv: 1x1 conv + bias + hardswish ----
        z = _matmul_cf(w2_ref[...], acc.astype(w2_ref.dtype))
        z = _hardswish(z + b2_ref[...]).astype(out_ref.dtype)

        # ---- fused concat(x_l, out_r) + channel_shuffle ----
        x_l = x_l_ref[0]
        rows = []
        for src in perm:                                   # static permutation
            if src < l_channels:
                rows.append(x_l[src:src + 1, :].astype(out_ref.dtype))
            else:
                rows.append(z[src - l_channels:src - l_channels + 1, :])
        out_ref[...] = jnp.concatenate(rows, axis=0).reshape(out_ref.shape)

    return kernel


def _dw_boundary_masks(H, W):
    """(9, H*W) f32 masks: 1 where the (dy, dx) tap reads inside the image."""
    hh = jnp.arange(H)[:, None]
    ww = jnp.arange(W)[None, :]
    rows = []
    for dy in (-1, 0, 1):
        for dx in (-1, 0, 1):
            ok = ((hh + dy >= 0) & (hh + dy < H) &
                  (ww + dx >= 0) & (ww + dx < W))
            rows.append(ok.reshape(-1))
    return jnp.stack(rows, axis=0).astype(jnp.float32)


def shufflev2_basic(x_nchw, params, l_channels, groups=2,
                    compute_dtype=jnp.float32):
    """Pallas-backed ShuffleV2Basic forward. x_nchw: (N, Cin, H, W) float32."""
    N, Cin, H, W = x_nchw.shape
    Cr = Cin - l_channels
    HW = H * W
    Cor = params["w1f"].shape[0]
    Ctot = l_channels + Cor
    assert Ctot % groups == 0, "channel_shuffle needs channels % groups == 0"
    cpg = Ctot // groups
    # Static post-shuffle permutation: out channel c <- concat channel perm[c].
    perm = tuple(g * cpg + j for j in range(cpg) for g in range(groups))

    cd = jnp.dtype(compute_dtype)

    # NCHW -> (N, C, H*W) is a free reshape and puts H*W on the lane axis.
    x_flat = x_nchw.reshape(N, Cin, HW)
    x_l = x_flat[:, :l_channels].astype(cd)
    x_r = x_flat[:, l_channels:].astype(cd)

    w1 = params["w1f"].astype(cd)                  # (Cor, Cr)   BN-scale folded
    w2 = params["w2f"].astype(cd)                  # (Cor, Cor)  BN-scale folded
    wdw = params["wdwf"].astype(jnp.float32)       # (Cor, 9)    BN-scale folded
    b1 = params["b1"].astype(jnp.float32)          # (Cor, 1)
    bdw = params["bdw"].astype(jnp.float32)        # (Cor, 1)
    b2 = params["b2"].astype(jnp.float32)          # (Cor, 1)
    mask = _dw_boundary_masks(H, W)                # (9, HW) f32

    kernel = _make_kernel(H, W, perm, l_channels)

    def _full(a):
        nd = a.ndim
        return pl.BlockSpec(a.shape, lambda n, _nd=nd: (0,) * _nd)

    in_specs = [
        pl.BlockSpec((1, l_channels, HW), lambda n: (n, 0, 0)),   # x_l
        pl.BlockSpec((1, Cr, HW), lambda n: (n, 0, 0)),           # x_r
        _full(w1), _full(b1), _full(wdw), _full(bdw),
        _full(w2), _full(b2), _full(mask),
    ]

    # Explicit VMEM budget: double-buffered input/output blocks + headroom.
    block_bytes = (l_channels + Cr + Ctot) * HW * cd.itemsize
    vmem_limit = int(min(64 << 20, max(8 << 20, 6 * block_bytes + (2 << 20))))

    out_flat = pl.pallas_call(
        kernel,
        out_shape=jax.ShapeDtypeStruct((N, Ctot, HW), cd),
        grid_spec=pltpu.PrefetchScalarGridSpec(
            num_scalar_prefetch=0,
            grid=(N,),
            in_specs=in_specs,
            out_specs=pl.BlockSpec((1, Ctot, HW), lambda n: (n, 0, 0))),
        compiler_params=pltpu.CompilerParams(
            dimension_semantics=("parallel",),
            vmem_limit_bytes=vmem_limit),
    )(x_l, x_r, w1, b1, wdw, bdw, w2, b2, mask)

    # Output is already concatenated, channel-shuffled and NCHW.
    return out_flat.reshape(N, Ctot, H, W)


# ---------------- deterministic parameter construction ----------------

def make_params(key, Cr, Cor, eps=1e-5):
    ks = jax.random.split(key, 15)

    def bn_fold(k0, k1, k2, k3, C):
        gamma = 1.0 + 0.1 * jax.random.normal(k0, (C,), jnp.float32)
        beta = 0.1 * jax.random.normal(k1, (C,), jnp.float32)
        mean = 0.1 * jax.random.normal(k2, (C,), jnp.float32)
        var = 1.0 + 0.1 * jnp.abs(jax.random.normal(k3, (C,), jnp.float32))
        scale = gamma / jnp.sqrt(var + eps)
        bias = beta - mean * scale
        return scale, bias

    # PyTorch-layout (OIHW) weights, used by the pure-JAX reference.
    w1_oihw = 0.5 * jax.random.normal(ks[0], (Cor, Cr, 1, 1), jnp.float32)
    wdw_oihw = 0.5 * jax.random.normal(ks[1], (Cor, 1, 3, 3), jnp.float32)
    w2_oihw = 0.5 * jax.random.normal(ks[2], (Cor, Cor, 1, 1), jnp.float32)
    s1, b1 = bn_fold(ks[3], ks[4], ks[5], ks[6], Cor)
    sdw, bdw = bn_fold(ks[7], ks[8], ks[9], ks[10], Cor)
    s2, b2 = bn_fold(ks[11], ks[12], ks[13], ks[14], Cor)

    ref_w = dict(w1_oihw=w1_oihw, wdw_oihw=wdw_oihw, w2_oihw=w2_oihw,
                 s1=s1, b1=b1, sdw=sdw, bdw=bdw, s2=s2, b2=b2)

    # Kernel-layout parameters with the BN scale folded into the conv weights.
    params = dict(
        w1f=s1[:, None] * w1_oihw[:, :, 0, 0],                  # (Cor, Cr)
        wdwf=sdw[:, None] * wdw_oihw[:, 0].reshape(Cor, 9),     # (Cor, 9)
        w2f=s2[:, None] * w2_oihw[:, :, 0, 0],                  # (Cor, Cor)
        b1=b1[:, None], bdw=bdw[:, None], b2=b2[:, None])       # (Cor, 1)
    return params, ref_w


# ---------------- pure-JAX reference (for verification) ----------------

def ref_forward(x, w, l_channels, groups=2):
    N, Cin, H, W = x.shape
    dn = ("NCHW", "OIHW", "NCHW")
    bn = lambda y, s, b: y * s[None, :, None, None] + b[None, :, None, None]

    x_l = x[:, :l_channels]
    x_r = x[:, l_channels:]

    y = lax.conv_general_dilated(x_r, w["w1_oihw"], (1, 1), "SAME",
                                 dimension_numbers=dn)
    y = _hardswish(bn(y, w["s1"], w["b1"]))
    Cor = y.shape[1]
    yd = lax.conv_general_dilated(y, w["wdw_oihw"], (1, 1), "SAME",
                                  feature_group_count=Cor,
                                  dimension_numbers=dn)
    yd = bn(yd, w["sdw"], w["bdw"])
    z = lax.conv_general_dilated(yd, w["w2_oihw"], (1, 1), "SAME",
                                 dimension_numbers=dn)
    z = _hardswish(bn(z, w["s2"], w["b2"]))

    out = jnp.concatenate([x_l, z], axis=1)
    C = out.shape[1]
    out = out.reshape(N, groups, C // groups, H, W)
    return jnp.transpose(out, (0, 2, 1, 3, 4)).reshape(N, C, H, W)


if __name__ == "__main__":
    # Module config (stride=1 so the left branch concatenates cleanly).
    N, Cin, Cout, H, W = 2, 8, 8, 16, 16
    c_ratio, groups = 0.5, 2
    l_channels = int(Cin * c_ratio)          # 4
    Cr = Cin - l_channels                    # 4
    Cor = Cout - l_channels                  # 4

    key = jax.random.PRNGKey(0)
    kx, kp = jax.random.split(key)
    x = jax.random.normal(kx, (N, Cin, H, W), jnp.float32)
    params, ref_w = make_params(kp, Cr, Cor)

    ref = jax.block_until_ready(ref_forward(x, ref_w, l_channels, groups=groups))

    # f32 path: tight correctness check.
    out_f32 = jax.block_until_ready(
        shufflev2_basic(x, params, l_channels, groups=groups,
                        compute_dtype=jnp.float32))
    assert out_f32.shape == (N, Cout, H, W), out_f32.shape
    err32 = float(jnp.max(jnp.abs(out_f32 - ref)))
    assert err32 < 1e-3, f"f32 mismatch vs reference, max abs err = {err32}"

    # bf16 activations/weights (f32 accumulation): looser check.
    out_bf16 = jax.block_until_ready(
        shufflev2_basic(x, params, l_channels, groups=groups,
                        compute_dtype=jnp.bfloat16))
    errbf = float(jnp.max(jnp.abs(out_bf16.astype(jnp.float32) - ref)))
    assert errbf < 3e-1, f"bf16 mismatch vs reference, max abs err = {errbf}"

    print("KERNEL_OK")
</pallas_src>

<mosaic_0001>
module attributes {stable_mosaic.version = 11 : i64} {
  func.func @kernel(%arg0: i32, %arg1: memref<1x4x256xf32, #tpu.memory_space<vmem>>, %arg2: memref<1x4x256xf32, #tpu.memory_space<vmem>>, %arg3: memref<4x4xf32, #tpu.memory_space<vmem>>, %arg4: memref<4x1xf32, #tpu.memory_space<vmem>>, %arg5: memref<4x9xf32, #tpu.memory_space<vmem>>, %arg6: memref<4x1xf32, #tpu.memory_space<vmem>>, %arg7: memref<4x4xf32, #tpu.memory_space<vmem>>, %arg8: memref<4x1xf32, #tpu.memory_space<vmem>>, %arg9: memref<9x256xf32, #tpu.memory_space<vmem>>, %arg10: memref<1x8x256xf32, #tpu.memory_space<vmem>>) attributes {dimension_semantics = [#tpu.dimension_semantics<parallel>], iteration_bounds = array<i64: 2>, scalar_prefetch = 0 : i64, scratch_operands = 0 : i64, tpu.core_type = #tpu.core_type<tc>, window_params = [{transform_indices = @transform_0, window_bounds = array<i64: 1, 4, 256>}, {transform_indices = @transform_1, window_bounds = array<i64: 1, 4, 256>}, {pipeline_mode = #tpu.pipeline_mode<synchronous>, transform_indices = @transform_2, window_bounds = array<i64: 4, 4>}, {pipeline_mode = #tpu.pipeline_mode<synchronous>, transform_indices = @transform_3, window_bounds = array<i64: 4, 1>}, {pipeline_mode = #tpu.pipeline_mode<synchronous>, transform_indices = @transform_4, window_bounds = array<i64: 4, 9>}, {pipeline_mode = #tpu.pipeline_mode<synchronous>, transform_indices = @transform_5, window_bounds = array<i64: 4, 1>}, {pipeline_mode = #tpu.pipeline_mode<synchronous>, transform_indices = @transform_6, window_bounds = array<i64: 4, 4>}, {pipeline_mode = #tpu.pipeline_mode<synchronous>, transform_indices = @transform_7, window_bounds = array<i64: 4, 1>}, {pipeline_mode = #tpu.pipeline_mode<synchronous>, transform_indices = @transform_8, window_bounds = array<i64: 9, 256>}, {transform_indices = @transform_9, window_bounds = array<i64: 1, 8, 256>}]} {
    %c0 = arith.constant 0 : index
    %c0_0 = arith.constant 0 : index
    %0 = vector.load %arg3[%c0, %c0_0] : memref<4x4xf32, #tpu.memory_space<vmem>>, vector<4x4xf32>
    %c0_1 = arith.constant 0 : index
    %c0_2 = arith.constant 0 : index
    %c0_3 = arith.constant 0 : index
    %1 = vector.load %arg2[%c0_1, %c0_2, %c0_3] : memref<1x4x256xf32, #tpu.memory_space<vmem>>, vector<1x4x256xf32>
    %2 = vector.shape_cast %1 : vector<1x4x256xf32> to vector<4x256xf32>
    %3 = vector.extract_strided_slice %0 {offsets = [0, 0], sizes = [4, 1], strides = [1, 1]} : vector<4x4xf32> to vector<4x1xf32>
    %4 = vector.extract_strided_slice %2 {offsets = [0, 0], sizes = [1, 256], strides = [1, 1]} : vector<4x256xf32> to vector<1x256xf32>
    %5 = vector.broadcast %3 : vector<4x1xf32> to vector<4x256xf32>
    %6 = vector.broadcast %4 : vector<1x256xf32> to vector<4x256xf32>
    %7 = arith.mulf %5, %6 : vector<4x256xf32>
    %8 = vector.extract_strided_slice %0 {offsets = [0, 1], sizes = [4, 1], strides = [1, 1]} : vector<4x4xf32> to vector<4x1xf32>
    %9 = vector.extract_strided_slice %2 {offsets = [1, 0], sizes = [1, 256], strides = [1, 1]} : vector<4x256xf32> to vector<1x256xf32>
    %10 = vector.broadcast %8 : vector<4x1xf32> to vector<4x256xf32>
    %11 = vector.broadcast %9 : vector<1x256xf32> to vector<4x256xf32>
    %12 = arith.mulf %10, %11 : vector<4x256xf32>
    %13 = arith.addf %7, %12 : vector<4x256xf32>
    %14 = vector.extract_strided_slice %0 {offsets = [0, 2], sizes = [4, 1], strides = [1, 1]} : vector<4x4xf32> to vector<4x1xf32>
    %15 = vector.extract_strided_slice %2 {offsets = [2, 0], sizes = [1, 256], strides = [1, 1]} : vector<4x256xf32> to vector<1x256xf32>
    %16 = vector.broadcast %14 : vector<4x1xf32> to vector<4x256xf32>
    %17 = vector.broadcast %15 : vector<1x256xf32> to vector<4x256xf32>
    %18 = arith.mulf %16, %17 : vector<4x256xf32>
    %19 = arith.addf %13, %18 : vector<4x256xf32>
    %20 = vector.extract_strided_slice %0 {offsets = [0, 3], sizes = [4, 1], strides = [1, 1]} : vector<4x4xf32> to vector<4x1xf32>
    %21 = vector.extract_strided_slice %2 {offsets = [3, 0], sizes = [1, 256], strides = [1, 1]} : vector<4x256xf32> to vector<1x256xf32>
    %22 = vector.broadcast %20 : vector<4x1xf32> to vector<4x256xf32>
    %23 = vector.broadcast %21 : vector<1x256xf32> to vector<4x256xf32>
    %24 = arith.mulf %22, %23 : vector<4x256xf32>
    %25 = arith.addf %19, %24 : vector<4x256xf32>
    %c0_4 = arith.constant 0 : index
    %c0_5 = arith.constant 0 : index
    %26 = vector.load %arg4[%c0_4, %c0_5] : memref<4x1xf32, #tpu.memory_space<vmem>>, vector<4x1xf32>
    %27 = vector.broadcast %26 : vector<4x1xf32> to vector<4x256xf32>
    %28 = arith.addf %25, %27 : vector<4x256xf32>
    %cst = arith.constant 3.000000e+00 : f32
    %29 = vector.broadcast %cst : f32 to vector<4x256xf32>
    %30 = arith.addf %28, %29 : vector<4x256xf32>
    %cst_6 = arith.constant 0.000000e+00 : f32
    %cst_7 = arith.constant 6.000000e+00 : f32
    %31 = vector.broadcast %cst_6 : f32 to vector<4x256xf32>
    %32 = arith.maximumf %31, %30 : vector<4x256xf32>
    %33 = vector.broadcast %cst_7 : f32 to vector<4x256xf32>
    %34 = arith.minimumf %33, %32 : vector<4x256xf32>
    %35 = arith.mulf %28, %34 : vector<4x256xf32>
    %cst_8 = arith.constant 0.166666672 : f32
    %36 = vector.broadcast %cst_8 : f32 to vector<4x256xf32>
    %37 = arith.mulf %35, %36 : vector<4x256xf32>
    %c0_9 = arith.constant 0 : index
    %c4 = arith.constant 4 : index
    %38 = vector.load %arg5[%c0_9, %c4] : memref<4x9xf32, #tpu.memory_space<vmem>>, vector<4x1xf32>
    %39 = vector.broadcast %38 : vector<4x1xf32> to vector<4x256xf32>
    %40 = arith.mulf %37, %39 : vector<4x256xf32>
    %c17_i32 = arith.constant 17 : i32
    %41 = tpu.dynamic_rotate %37 by %c17_i32 dim 1 : vector<4x256xf32>, i32 -> vector<4x256xf32>
    %c0_10 = arith.constant 0 : index
    %c0_11 = arith.constant 0 : index
    %42 = vector.load %arg9[%c0_10, %c0_11] : memref<9x256xf32, #tpu.memory_space<vmem>>, vector<1x256xf32>
    %43 = vector.broadcast %42 : vector<1x256xf32> to vector<4x256xf32>
    %44 = arith.mulf %41, %43 : vector<4x256xf32>
    %c0_12 = arith.constant 0 : index
    %c0_13 = arith.constant 0 : index
    %45 = vector.load %arg5[%c0_12, %c0_13] : memref<4x9xf32, #tpu.memory_space<vmem>>, vector<4x1xf32>
    %46 = vector.broadcast %45 : vector<4x1xf32> to vector<4x256xf32>
    %47 = arith.mulf %44, %46 : vector<4x256xf32>
    %48 = arith.addf %40, %47 : vector<4x256xf32>
    %c16_i32 = arith.constant 16 : i32
    %49 = tpu.dynamic_rotate %37 by %c16_i32 dim 1 : vector<4x256xf32>, i32 -> vector<4x256xf32>
    %c1 = arith.constant 1 : index
    %c0_14 = arith.constant 0 : index
    %50 = vector.load %arg9[%c1, %c0_14] : memref<9x256xf32, #tpu.memory_space<vmem>>, vector<1x256xf32>
    %51 = vector.broadcast %50 : vector<1x256xf32> to vector<4x256xf32>
    %52 = arith.mulf %49, %51 : vector<4x256xf32>
    %c0_15 = arith.constant 0 : index
    %c1_16 = arith.constant 1 : index
    %53 = vector.load %arg5[%c0_15, %c1_16] : memref<4x9xf32, #tpu.memory_space<vmem>>, vector<4x1xf32>
    %54 = vector.broadcast %53 : vector<4x1xf32> to vector<4x256xf32>
    %55 = arith.mulf %52, %54 : vector<4x256xf32>
    %56 = arith.addf %48, %55 : vector<4x256xf32>
    %c15_i32 = arith.constant 15 : i32
    %57 = tpu.dynamic_rotate %37 by %c15_i32 dim 1 : vector<4x256xf32>, i32 -> vector<4x256xf32>
    %c2 = arith.constant 2 : index
    %c0_17 = arith.constant 0 : index
    %58 = vector.load %arg9[%c2, %c0_17] : memref<9x256xf32, #tpu.memory_space<vmem>>, vector<1x256xf32>
    %59 = vector.broadcast %58 : vector<1x256xf32> to vector<4x256xf32>
    %60 = arith.mulf %57, %59 : vector<4x256xf32>
    %c0_18 = arith.constant 0 : index
    %c2_19 = arith.constant 2 : index
    %61 = vector.load %arg5[%c0_18, %c2_19] : memref<4x9xf32, #tpu.memory_space<vmem>>, vector<4x1xf32>
    %62 = vector.broadcast %61 : vector<4x1xf32> to vector<4x256xf32>
    %63 = arith.mulf %60, %62 : vector<4x256xf32>
    %64 = arith.addf %56, %63 : vector<4x256xf32>
    %c1_i32 = arith.constant 1 : i32
    %65 = tpu.dynamic_rotate %37 by %c1_i32 dim 1 : vector<4x256xf32>, i32 -> vector<4x256xf32>
    %c3 = arith.constant 3 : index
    %c0_20 = arith.constant 0 : index
    %66 = vector.load %arg9[%c3, %c0_20] : memref<9x256xf32, #tpu.memory_space<vmem>>, vector<1x256xf32>
    %67 = vector.broadcast %66 : vector<1x256xf32> to vector<4x256xf32>
    %68 = arith.mulf %65, %67 : vector<4x256xf32>
    %c0_21 = arith.constant 0 : index
    %c3_22 = arith.constant 3 : index
    %69 = vector.load %arg5[%c0_21, %c3_22] : memref<4x9xf32, #tpu.memory_space<vmem>>, vector<4x1xf32>
    %70 = vector.broadcast %69 : vector<4x1xf32> to vector<4x256xf32>
    %71 = arith.mulf %68, %70 : vector<4x256xf32>
    %72 = arith.addf %64, %71 : vector<4x256xf32>
    %c255_i32 = arith.constant 255 : i32
    %73 = tpu.dynamic_rotate %37 by %c255_i32 dim 1 : vector<4x256xf32>, i32 -> vector<4x256xf32>
    %c5 = arith.constant 5 : index
    %c0_23 = arith.constant 0 : index
    %74 = vector.load %arg9[%c5, %c0_23] : memref<9x256xf32, #tpu.memory_space<vmem>>, vector<1x256xf32>
    %75 = vector.broadcast %74 : vector<1x256xf32> to vector<4x256xf32>
    %76 = arith.mulf %73, %75 : vector<4x256xf32>
    %c0_24 = arith.constant 0 : index
    %c5_25 = arith.constant 5 : index
    %77 = vector.load %arg5[%c0_24, %c5_25] : memref<4x9xf32, #tpu.memory_space<vmem>>, vector<4x1xf32>
    %78 = vector.broadcast %77 : vector<4x1xf32> to vector<4x256xf32>
    %79 = arith.mulf %76, %78 : vector<4x256xf32>
    %80 = arith.addf %72, %79 : vector<4x256xf32>
    %c241_i32 = arith.constant 241 : i32
    %81 = tpu.dynamic_rotate %37 by %c241_i32 dim 1 : vector<4x256xf32>, i32 -> vector<4x256xf32>
    %c6 = arith.constant 6 : index
    %c0_26 = arith.constant 0 : index
    %82 = vector.load %arg9[%c6, %c0_26] : memref<9x256xf32, #tpu.memory_space<vmem>>, vector<1x256xf32>
    %83 = vector.broadcast %82 : vector<1x256xf32> to vector<4x256xf32>
    %84 = arith.mulf %81, %83 : vector<4x256xf32>
    %c0_27 = arith.constant 0 : index
    %c6_28 = arith.constant 6 : index
    %85 = vector.load %arg5[%c0_27, %c6_28] : memref<4x9xf32, #tpu.memory_space<vmem>>, vector<4x1xf32>
    %86 = vector.broadcast %85 : vector<4x1xf32> to vector<4x256xf32>
    %87 = arith.mulf %84, %86 : vector<4x256xf32>
    %88 = arith.addf %80, %87 : vector<4x256xf32>
    %c240_i32 = arith.constant 240 : i32
    %89 = tpu.dynamic_rotate %37 by %c240_i32 dim 1 : vector<4x256xf32>, i32 -> vector<4x256xf32>
    %c7 = arith.constant 7 : index
    %c0_29 = arith.constant 0 : index
    %90 = vector.load %arg9[%c7, %c0_29] : memref<9x256xf32, #tpu.memory_space<vmem>>, vector<1x256xf32>
    %91 = vector.broadcast %90 : vector<1x256xf32> to vector<4x256xf32>
    %92 = arith.mulf %89, %91 : vector<4x256xf32>
    %c0_30 = arith.constant 0 : index
    %c7_31 = arith.constant 7 : index
    %93 = vector.load %arg5[%c0_30, %c7_31] : memref<4x9xf32, #tpu.memory_space<vmem>>, vector<4x1xf32>
    %94 = vector.broadcast %93 : vector<4x1xf32> to vector<4x256xf32>
    %95 = arith.mulf %92, %94 : vector<4x256xf32>
    %96 = arith.addf %88, %95 : vector<4x256xf32>
    %c239_i32 = arith.constant 239 : i32
    %97 = tpu.dynamic_rotate %37 by %c239_i32 dim 1 : vector<4x256xf32>, i32 -> vector<4x256xf32>
    %c8 = arith.constant 8 : index
    %c0_32 = arith.constant 0 : index
    %98 = vector.load %arg9[%c8, %c0_32] : memref<9x256xf32, #tpu.memory_space<vmem>>, vector<1x256xf32>
    %99 = vector.broadcast %98 : vector<1x256xf32> to vector<4x256xf32>
    %100 = arith.mulf %97, %99 : vector<4x256xf32>
    %c0_33 = arith.constant 0 : index
    %c8_34 = arith.constant 8 : index
    %101 = vector.load %arg5[%c0_33, %c8_34] : memref<4x9xf32, #tpu.memory_space<vmem>>, vector<4x1xf32>
    %102 = vector.broadcast %101 : vector<4x1xf32> to vector<4x256xf32>
    %103 = arith.mulf %100, %102 : vector<4x256xf32>
    %104 = arith.addf %96, %103 : vector<4x256xf32>
    %c0_35 = arith.constant 0 : index
    %c0_36 = arith.constant 0 : index
    %105 = vector.load %arg6[%c0_35, %c0_36] : memref<4x1xf32, #tpu.memory_space<vmem>>, vector<4x1xf32>
    %106 = vector.broadcast %105 : vector<4x1xf32> to vector<4x256xf32>
    %107 = arith.addf %104, %106 : vector<4x256xf32>
    %c0_37 = arith.constant 0 : index
    %c0_38 = arith.constant 0 : index
    %108 = vector.load %arg7[%c0_37, %c0_38] : memref<4x4xf32, #tpu.memory_space<vmem>>, vector<4x4xf32>
    %109 = vector.extract_strided_slice %108 {offsets = [0, 0], sizes = [4, 1], strides = [1, 1]} : vector<4x4xf32> to vector<4x1xf32>
    %110 = vector.extract_strided_slice %107 {offsets = [0, 0], sizes = [1, 256], strides = [1, 1]} : vector<4x256xf32> to vector<1x256xf32>
    %111 = vector.broadcast %109 : vector<4x1xf32> to vector<4x256xf32>
    %112 = vector.broadcast %110 : vector<1x256xf32> to vector<4x256xf32>
    %113 = arith.mulf %111, %112 : vector<4x256xf32>
    %114 = vector.extract_strided_slice %108 {offsets = [0, 1], sizes = [4, 1], strides = [1, 1]} : vector<4x4xf32> to vector<4x1xf32>
    %115 = vector.extract_strided_slice %107 {offsets = [1, 0], sizes = [1, 256], strides = [1, 1]} : vector<4x256xf32> to vector<1x256xf32>
    %116 = vector.broadcast %114 : vector<4x1xf32> to vector<4x256xf32>
    %117 = vector.broadcast %115 : vector<1x256xf32> to vector<4x256xf32>
    %118 = arith.mulf %116, %117 : vector<4x256xf32>
    %119 = arith.addf %113, %118 : vector<4x256xf32>
    %120 = vector.extract_strided_slice %108 {offsets = [0, 2], sizes = [4, 1], strides = [1, 1]} : vector<4x4xf32> to vector<4x1xf32>
    %121 = vector.extract_strided_slice %107 {offsets = [2, 0], sizes = [1, 256], strides = [1, 1]} : vector<4x256xf32> to vector<1x256xf32>
    %122 = vector.broadcast %120 : vector<4x1xf32> to vector<4x256xf32>
    %123 = vector.broadcast %121 : vector<1x256xf32> to vector<4x256xf32>
    %124 = arith.mulf %122, %123 : vector<4x256xf32>
    %125 = arith.addf %119, %124 : vector<4x256xf32>
    %126 = vector.extract_strided_slice %108 {offsets = [0, 3], sizes = [4, 1], strides = [1, 1]} : vector<4x4xf32> to vector<4x1xf32>
    %127 = vector.extract_strided_slice %107 {offsets = [3, 0], sizes = [1, 256], strides = [1, 1]} : vector<4x256xf32> to vector<1x256xf32>
    %128 = vector.broadcast %126 : vector<4x1xf32> to vector<4x256xf32>
    %129 = vector.broadcast %127 : vector<1x256xf32> to vector<4x256xf32>
    %130 = arith.mulf %128, %129 : vector<4x256xf32>
    %131 = arith.addf %125, %130 : vector<4x256xf32>
    %c0_39 = arith.constant 0 : index
    %c0_40 = arith.constant 0 : index
    %132 = vector.load %arg8[%c0_39, %c0_40] : memref<4x1xf32, #tpu.memory_space<vmem>>, vector<4x1xf32>
    %133 = vector.broadcast %132 : vector<4x1xf32> to vector<4x256xf32>
    %134 = arith.addf %131, %133 : vector<4x256xf32>
    %cst_41 = arith.constant 3.000000e+00 : f32
    %135 = vector.broadcast %cst_41 : f32 to vector<4x256xf32>
    %136 = arith.addf %134, %135 : vector<4x256xf32>
    %cst_42 = arith.constant 0.000000e+00 : f32
    %cst_43 = arith.constant 6.000000e+00 : f32
    %137 = vector.broadcast %cst_42 : f32 to vector<4x256xf32>
    %138 = arith.maximumf %137, %136 : vector<4x256xf32>
    %139 = vector.broadcast %cst_43 : f32 to vector<4x256xf32>
    %140 = arith.minimumf %139, %138 : vector<4x256xf32>
    %141 = arith.mulf %134, %140 : vector<4x256xf32>
    %cst_44 = arith.constant 0.166666672 : f32
    %142 = vector.broadcast %cst_44 : f32 to vector<4x256xf32>
    %143 = arith.mulf %141, %142 : vector<4x256xf32>
    %c0_45 = arith.constant 0 : index
    %c0_46 = arith.constant 0 : index
    %c0_47 = arith.constant 0 : index
    %144 = vector.load %arg1[%c0_45, %c0_46, %c0_47] : memref<1x4x256xf32, #tpu.memory_space<vmem>>, vector<1x4x256xf32>
    %145 = vector.shape_cast %144 : vector<1x4x256xf32> to vector<4x256xf32>
    %146 = vector.extract_strided_slice %145 {offsets = [0, 0], sizes = [1, 256], strides = [1, 1]} : vector<4x256xf32> to vector<1x256xf32>
    %147 = vector.extract_strided_slice %143 {offsets = [0, 0], sizes = [1, 256], strides = [1, 1]} : vector<4x256xf32> to vector<1x256xf32>
    %148 = vector.extract_strided_slice %145 {offsets = [1, 0], sizes = [1, 256], strides = [1, 1]} : vector<4x256xf32> to vector<1x256xf32>
    %149 = vector.extract_strided_slice %143 {offsets = [1, 0], sizes = [1, 256], strides = [1, 1]} : vector<4x256xf32> to vector<1x256xf32>
    %150 = vector.extract_strided_slice %145 {offsets = [2, 0], sizes = [1, 256], strides = [1, 1]} : vector<4x256xf32> to vector<1x256xf32>
    %151 = vector.extract_strided_slice %143 {offsets = [2, 0], sizes = [1, 256], strides = [1, 1]} : vector<4x256xf32> to vector<1x256xf32>
    %152 = vector.extract_strided_slice %145 {offsets = [3, 0], sizes = [1, 256], strides = [1, 1]} : vector<4x256xf32> to vector<1x256xf32>
    %153 = vector.extract_strided_slice %143 {offsets = [3, 0], sizes = [1, 256], strides = [1, 1]} : vector<4x256xf32> to vector<1x256xf32>
    %154 = tpu.concatenate %146, %147, %148, %149, %150, %151, %152, %153 in 0 : vector<1x256xf32>, vector<1x256xf32>, vector<1x256xf32>, vector<1x256xf32>, vector<1x256xf32>, vector<1x256xf32>, vector<1x256xf32>, vector<1x256xf32> -> vector<8x256xf32>
    %155 = vector.shape_cast %154 : vector<8x256xf32> to vector<1x8x256xf32>
    %c0_48 = arith.constant 0 : index
    %c0_49 = arith.constant 0 : index
    %c0_50 = arith.constant 0 : index
    %156 = vector.load %arg10[%c0_48, %c0_49, %c0_50] : memref<1x8x256xf32, #tpu.memory_space<vmem>>, vector<1x8x256xf32>
    tpu.vector_store %arg10[%c0_48, %c0_49, %c0_50], %155 {strides = array<i32>} : memref<1x8x256xf32, #tpu.memory_space<vmem>>, vector<1x8x256xf32>,
    return
  }
  func.func @transform_0(%arg0: i32) -> (i32, i32, i32) {
    %c0_i32 = arith.constant 0 : i32
    %c0_i32_0 = arith.constant 0 : i32
    %c0_i32_1 = arith.constant 0 : i32
    return %arg0, %c0_i32, %c0_i32_0 : i32, i32, i32
  }
  func.func @transform_1(%arg0: i32) -> (i32, i32, i32) {
    %c0_i32 = arith.constant 0 : i32
    %c0_i32_0 = arith.constant 0 : i32
    %c0_i32_1 = arith.constant 0 : i32
    return %arg0, %c0_i32, %c0_i32_0 : i32, i32, i32
  }
  func.func @transform_2(%arg0: i32) -> (i32, i32) {
    %c0_i32 = arith.constant 0 : i32
    %c0_i32_0 = arith.constant 0 : i32
    %c0_i32_1 = arith.constant 0 : i32
    return %c0_i32, %c0_i32_0 : i32, i32
  }
  func.func @transform_3(%arg0: i32) -> (i32, i32) {
    %c0_i32 = arith.constant 0 : i32
    %c0_i32_0 = arith.constant 0 : i32
    %c0_i32_1 = arith.constant 0 : i32
    return %c0_i32, %c0_i32_0 : i32, i32
  }
  func.func @transform_4(%arg0: i32) -> (i32, i32) {
    %c0_i32 = arith.constant 0 : i32
    %c0_i32_0 = arith.constant 0 : i32
    %c0_i32_1 = arith.constant 0 : i32
    return %c0_i32, %c0_i32_0 : i32, i32
  }
  func.func @transform_5(%arg0: i32) -> (i32, i32) {
    %c0_i32 = arith.constant 0 : i32
    %c0_i32_0 = arith.constant 0 : i32
    %c0_i32_1 = arith.constant 0 : i32
    return %c0_i32, %c0_i32_0 : i32, i32
  }
  func.func @transform_6(%arg0: i32) -> (i32, i32) {
    %c0_i32 = arith.constant 0 : i32
    %c0_i32_0 = arith.constant 0 : i32
    %c0_i32_1 = arith.constant 0 : i32
    return %c0_i32, %c0_i32_0 : i32, i32
  }
  func.func @transform_7(%arg0: i32) -> (i32, i32) {
    %c0_i32 = arith.constant 0 : i32
    %c0_i32_0 = arith.constant 0 : i32
    %c0_i32_1 = arith.constant 0 : i32
    return %c0_i32, %c0_i32_0 : i32, i32
  }
  func.func @transform_8(%arg0: i32) -> (i32, i32) {
    %c0_i32 = arith.constant 0 : i32
    %c0_i32_0 = arith.constant 0 : i32
    %c0_i32_1 = arith.constant 0 : i32
    return %c0_i32, %c0_i32_0 : i32, i32
  }
  func.func @transform_9(%arg0: i32) -> (i32, i32, i32) {
    %c0_i32 = arith.constant 0 : i32
    %c0_i32_0 = arith.constant 0 : i32
    %c0_i32_1 = arith.constant 0 : i32
    return %arg0, %c0_i32, %c0_i32_0 : i32, i32, i32
  }
}

</mosaic_0001>

<llo_original>
// kernel: tpu_custom_call.1
$region0: #{tpu_custom_call.1}
  #allocation0 [shape = 'u32[]', space=smem, size = 0x4, offset = 0x4, fixed_abs, tag = 'smem constant byte address 0x4 - core index']
  #allocation1 [shape = 'u32[144,128]{1,0:T(1,128)}', space=vmem, size = 0x12000, scoped, tag = 'internal scratch']
  %s0 = inlined_call_operand.hbm [shape: f32[2,4,256], index: 0, kind: input, shape index: {}]
  %s1 = inlined_call_operand.hbm [shape: f32[2,4,256], index: 1, kind: input, shape index: {}]
  %s2 = inlined_call_operand.vmem [shape: f32[4,4], index: 2, kind: input, shape index: {}]
  %s3 = inlined_call_operand.vmem [shape: f32[4,1], index: 3, kind: input, shape index: {}]
  %s4 = inlined_call_operand.vmem [shape: f32[4,9], index: 4, kind: input, shape index: {}]
  %s5 = inlined_call_operand.vmem [shape: f32[4,1], index: 5, kind: input, shape index: {}]
  %s6 = inlined_call_operand.vmem [shape: f32[4,4], index: 6, kind: input, shape index: {}]
  %s7 = inlined_call_operand.vmem [shape: f32[4,1], index: 7, kind: input, shape index: {}]
  %s8 = inlined_call_operand.vmem [shape: f32[9,256], index: 8, kind: input, shape index: {}]
  %s9 = inlined_call_operand.hbm [shape: f32[2,8,256], index: 9, kind: output, shape index: {}]
  %s10 = sld [smem:[#allocation0]]
  $region77: #{tpu_custom_call.1} parent=0
    _
  %s12 = ssub.s32 1, %s10
  %s13 = scalar_select 0, %s12, %s10
  $region1: #{tpu_custom_call.1} parent=0
    #allocation2 [shape = 'u8[8192]{0}', space=vmem, size = 0x2000, scoped, tag = 'input window, operand 0']
    #allocation3 [shape = 's32[2]{0}', space=sflag, size = 0x8, scoped, tag = 'scoped memory for tpu_custom_call.1']
    #allocation4 [shape = 's32[2]{0}', space=sflag, size = 0x8, scoped, tag = 'scoped memory for tpu_custom_call.1']
    #allocation5 [shape = 'u8[8192]{0}', space=vmem, size = 0x2000, scoped, tag = 'input window, operand 1']
    #allocation6 [shape = 's32[2]{0}', space=sflag, size = 0x8, scoped, tag = 'scoped memory for tpu_custom_call.1']
    #allocation7 [shape = 'u8[16384]{0}', space=vmem, size = 0x4000, scoped, tag = 'output window, operand 0']
    %14 = vsyncpa [#allocation3], 0
    %s15 = scalar_lea.sflag [#allocation3], 1
    %16 = vsyncpa %s15, 0
    %17 = vsyncpa [#allocation6], 0
    %s18 = scalar_lea.sflag [#allocation6], 1
    %19 = vsyncpa %s18, 0
    %20 = vsyncpa [#allocation4], 0
    %s21 = scalar_lea.sflag [#allocation4], 1
    %22 = vsyncpa %s21, 0
    loop: start=0, step=1, limit=4
    $region2: #{tpu_custom_call.1} parent=1 // loop_pre_header
      _
    $region3: #{tpu_custom_call.1} parent=1 // loop_header
      %s24 = sphi 0, %s28
      %p25 = scmp.ge.s32.totalorder %s24, 4
      %s34 = sphi 0, %s36
      %s37 = sphi 0, %s34
      %s38 = sphi 0, %s37
      %s54 = sphi 0, %s38
      %s60 = sphi 0, %s62
      %s63 = sphi 0, %s60
      %s64 = sphi 0, %s63
      %s80 = sphi 0, %s64
      %s84 = sphi 0, %s84
      %s86 = sphi 0, %s84
      %s87 = sphi 0, %s86
      %s101 = sphi 0, %s87
      %s105 = sphi 0, %s105
      %s107 = sphi 0, %s105
      %s108 = sphi 0, %s107
      %s122 = sphi 0, %s108
      %s126 = sphi 0, %s126
      %s128 = sphi 0, %s126
      %s129 = sphi 0, %s128
      %s143 = sphi 0, %s129
      %s147 = sphi 0, %s147
      %s149 = sphi 0, %s147
      %s150 = sphi 0, %s149
      %s164 = sphi 0, %s150
      %s168 = sphi 0, %s168
      %s170 = sphi 0, %s168
      %s171 = sphi 0, %s170
      %s185 = sphi 0, %s171
      %s189 = sphi 0, %s189
      %s191 = sphi 0, %s189
      %s192 = sphi 0, %s191
      %s206 = sphi 0, %s192
      %s210 = sphi 0, %s210
      %s212 = sphi 0, %s210
      %s213 = sphi 0, %s212
      %s227 = sphi 0, %s213
      %s233 = sphi 0, %s235
      %s236 = sphi 0, %s233
      %s237 = sphi 0, %s236
      %s253 = sphi 0, %s237
    $region4: #{tpu_custom_call.1} parent=1 // loop_header_branch
      %27 = sbr.rel (%p25) target = $region8
    $region5: #{tpu_custom_call.1} parent=1 // loop_body
      %s29 = ssub.s32 %s24, 1
      %s30 = ssub.s32 %s24, 2
      %s31 = sadd.s32 %s24, 1
      %s32 = ssub.s32 %s24, %s31
      %p33 = scmp.eq.s32.totalorder %s32, 0
      %s35 = sadd.s32 %s34, 1
      %s36 = scalar_select %p33, %s34, %s35
      %p39 = pneg %p33
      %p40 = scmp.eq.s32.totalorder %s24, 1
      %p41 = por %p39, %p40
      %p42 = scmp.ne.s32.totalorder %s34, %s37
      %p43 = scmp.eq.s32.totalorder %s24, 0
      %p44 = por %p42, %p43
      %p45 = scmp.ne.s32.totalorder %s34, %s37
      %p46 = scmp.eq.s32.totalorder %s29, 1
      %p47 = por %p45, %p46
      %p48 = scmp.ne.s32.totalorder %s37, %s38
      %p49 = scmp.eq.s32.totalorder %s29, 0
      %p50 = por %p48, %p49
      %p51 = scmp.ne.s32.totalorder %s37, %s38
      %p52 = scmp.eq.s32.totalorder %s30, 1
      %p53 = por %p51, %p52
      %p55 = scmp.ne.s32.totalorder %s38, %s54
      %p56 = scmp.eq.s32.totalorder %s30, 0
      %p57 = por %p55, %p56
      %s58 = ssub.s32 %s24, %s31
      %p59 = scmp.eq.s32.totalorder %s58, 0
      %s61 = sadd.s32 %s60, 1
      %s62 = scalar_select %p59, %s60, %s61
      %p65 = pneg %p59
      %p66 = scmp.eq.s32.totalorder %s24, 1
      %p67 = por %p65, %p66
      %p68 = scmp.ne.s32.totalorder %s60, %s63
      %p69 = scmp.eq.s32.totalorder %s24, 0
      %p70 = por %p68, %p69
      %p71 = scmp.ne.s32.totalorder %s60, %s63
      %p72 = scmp.eq.s32.totalorder %s29, 1
      %p73 = por %p71, %p72
      %p74 = scmp.ne.s32.totalorder %s63, %s64
      %p75 = scmp.eq.s32.totalorder %s29, 0
      %p76 = por %p74, %p75
      %p77 = scmp.ne.s32.totalorder %s63, %s64
      %p78 = scmp.eq.s32.totalorder %s30, 1
      %p79 = por %p77, %p78
      %p81 = scmp.ne.s32.totalorder %s64, %s80
      %p82 = scmp.eq.s32.totalorder %s30, 0
      %p83 = por %p81, %p82
      %s85 = sadd.s32 %s84, 1
      %p88 = scmp.eq.s32.totalorder %s24, 1
      %p89 = scmp.ne.s32.totalorder %s84, %s86
      %p90 = scmp.eq.s32.totalorder %s24, 0
      %p91 = por %p89, %p90
      %p92 = scmp.ne.s32.totalorder %s84, %s86
      %p93 = scmp.eq.s32.totalorder %s29, 1
      %p94 = por %p92, %p93
      %p95 = scmp.ne.s32.totalorder %s86, %s87
      %p96 = scmp.eq.s32.totalorder %s29, 0
      %p97 = por %p95, %p96
      %p98 = scmp.ne.s32.totalorder %s86, %s87
      %p99 = scmp.eq.s32.totalorder %s30, 1
      %p100 = por %p98, %p99
      %p102 = scmp.ne.s32.totalorder %s87, %s101
      %p103 = scmp.eq.s32.totalorder %s30, 0
      %p104 = por %p102, %p103
      %s106 = sadd.s32 %s105, 1
      %p109 = scmp.eq.s32.totalorder %s24, 1
      %p110 = scmp.ne.s32.totalorder %s105, %s107
      %p111 = scmp.eq.s32.totalorder %s24, 0
      %p112 = por %p110, %p111
      %p113 = scmp.ne.s32.totalorder %s105, %s107
      %p114 = scmp.eq.s32.totalorder %s29, 1
      %p115 = por %p113, %p114
      %p116 = scmp.ne.s32.totalorder %s107, %s108
      %p117 = scmp.eq.s32.totalorder %s29, 0
      %p118 = por %p116, %p117
      %p119 = scmp.ne.s32.totalorder %s107, %s108
      %p120 = scmp.eq.s32.totalorder %s30, 1
      %p121 = por %p119, %p120
      %p123 = scmp.ne.s32.totalorder %s108, %s122
      %p124 = scmp.eq.s32.totalorder %s30, 0
      %p125 = por %p123, %p124
      %s127 = sadd.s32 %s126, 1
      %p130 = scmp.eq.s32.totalorder %s24, 1
      %p131 = scmp.ne.s32.totalorder %s126, %s128
      %p132 = scmp.eq.s32.totalorder %s24, 0
      %p133 = por %p131, %p132
      %p134 = scmp.ne.s32.totalorder %s126, %s128
      %p135 = scmp.eq.s32.totalorder %s29, 1
      %p136 = por %p134, %p135
      %p137 = scmp.ne.s32.totalorder %s128, %s129
      %p138 = scmp.eq.s32.totalorder %s29, 0
      %p139 = por %p137, %p138
      %p140 = scmp.ne.s32.totalorder %s128, %s129
      %p141 = scmp.eq.s32.totalorder %s30, 1
      %p142 = por %p140, %p141
      %p144 = scmp.ne.s32.totalorder %s129, %s143
      %p145 = scmp.eq.s32.totalorder %s30, 0
      %p146 = por %p144, %p145
      %s148 = sadd.s32 %s147, 1
      %p151 = scmp.eq.s32.totalorder %s24, 1
      %p152 = scmp.ne.s32.totalorder %s147, %s149
      %p153 = scmp.eq.s32.totalorder %s24, 0
      %p154 = por %p152, %p153
      %p155 = scmp.ne.s32.totalorder %s147, %s149
      %p156 = scmp.eq.s32.totalorder %s29, 1
      %p157 = por %p155, %p156
      %p158 = scmp.ne.s32.totalorder %s149, %s150
      %p159 = scmp.eq.s32.totalorder %s29, 0
      %p160 = por %p158, %p159
      %p161 = scmp.ne.s32.totalorder %s149, %s150
      %p162 = scmp.eq.s32.totalorder %s30, 1
      %p163 = por %p161, %p162
      %p165 = scmp.ne.s32.totalorder %s150, %s164
      %p166 = scmp.eq.s32.totalorder %s30, 0
      %p167 = por %p165, %p166
      %s169 = sadd.s32 %s168, 1
      %p172 = scmp.eq.s32.totalorder %s24, 1
      %p173 = scmp.ne.s32.totalorder %s168, %s170
      %p174 = scmp.eq.s32.totalorder %s24, 0
      %p175 = por %p173, %p174
      %p176 = scmp.ne.s32.totalorder %s168, %s170
      %p177 = scmp.eq.s32.totalorder %s29, 1
      %p178 = por %p176, %p177
      %p179 = scmp.ne.s32.totalorder %s170, %s171
      %p180 = scmp.eq.s32.totalorder %s29, 0
      %p181 = por %p179, %p180
      %p182 = scmp.ne.s32.totalorder %s170, %s171
      %p183 = scmp.eq.s32.totalorder %s30, 1
      %p184 = por %p182, %p183
      %p186 = scmp.ne.s32.totalorder %s171, %s185
      %p187 = scmp.eq.s32.totalorder %s30, 0
      %p188 = por %p186, %p187
      %s190 = sadd.s32 %s189, 1
      %p193 = scmp.eq.s32.totalorder %s24, 1
      %p194 = scmp.ne.s32.totalorder %s189, %s191
      %p195 = scmp.eq.s32.totalorder %s24, 0
      %p196 = por %p194, %p195
      %p197 = scmp.ne.s32.totalorder %s189, %s191
      %p198 = scmp.eq.s32.totalorder %s29, 1
      %p199 = por %p197, %p198
      %p200 = scmp.ne.s32.totalorder %s191, %s192
      %p201 = scmp.eq.s32.totalorder %s29, 0
      %p202 = por %p200, %p201
      %p203 = scmp.ne.s32.totalorder %s191, %s192
      %p204 = scmp.eq.s32.totalorder %s30, 1
      %p205 = por %p203, %p204
      %p207 = scmp.ne.s32.totalorder %s192, %s206
      %p208 = scmp.eq.s32.totalorder %s30, 0
      %p209 = por %p207, %p208
      %s211 = sadd.s32 %s210, 1
      %p214 = scmp.eq.s32.totalorder %s24, 1
      %p215 = scmp.ne.s32.totalorder %s210, %s212
      %p216 = scmp.eq.s32.totalorder %s24, 0
      %p217 = por %p215, %p216
      %p218 = scmp.ne.s32.totalorder %s210, %s212
      %p219 = scmp.eq.s32.totalorder %s29, 1
      %p220 = por %p218, %p219
      %p221 = scmp.ne.s32.totalorder %s212, %s213
      %p222 = scmp.eq.s32.totalorder %s29, 0
      %p223 = por %p221, %p222
      %p224 = scmp.ne.s32.totalorder %s212, %s213
      %p225 = scmp.eq.s32.totalorder %s30, 1
      %p226 = por %p224, %p225
      %p228 = scmp.ne.s32.totalorder %s213, %s227
      %p229 = scmp.eq.s32.totalorder %s30, 0
      %p230 = por %p228, %p229
      %s231 = ssub.s32 %s24, %s31
      %p232 = scmp.eq.s32.totalorder %s231, 0
      %s234 = sadd.s32 %s233, 1
      %s235 = scalar_select %p232, %s233, %s234
      %p238 = pneg %p232
      %p239 = scmp.eq.s32.totalorder %s24, 1
      %p240 = por %p238, %p239
      %p241 = scmp.ne.s32.totalorder %s233, %s236
      %p242 = scmp.eq.s32.totalorder %s24, 0
      %p243 = por %p241, %p242
      %p244 = scmp.ne.s32.totalorder %s233, %s236
      %p245 = scmp.eq.s32.totalorder %s29, 1
      %p246 = por %p244, %p245
      %p247 = scmp.ne.s32.totalorder %s236, %s237
      %p248 = scmp.eq.s32.totalorder %s29, 0
      %p249 = por %p247, %p248
      %p250 = scmp.ne.s32.totalorder %s236, %s237
      %p251 = scmp.eq.s32.totalorder %s30, 1
      %p252 = por %p250, %p251
      %p254 = scmp.ne.s32.totalorder %s237, %s253
      %p255 = scmp.eq.s32.totalorder %s30, 0
      %p256 = por %p254, %p255
      %p257 = scmp.le.s32.totalorder 1, %s24
      %p258 = scmp.lt.s32.totalorder %s24, 3
      %p259 = pnand %p257, %p258
      %p260 = pneg %p259
      // Predicated region
      $region9: #{tpu_custom_call.1} parent=5 // pred_check
        _
      $region10: #{tpu_custom_call.1} parent=5 // pred_check_branch
        %262 = sbr.rel (%p259) target = $region12
      $region11: #{tpu_custom_call.1} parent=5 // pred_region
        %s263 = ssub.s32 %s24, 1
        // Predicated region
        $region13: #{tpu_custom_call.1} parent=11 // pred_check
          %p264 = pneg %p97
        $region14: #{tpu_custom_call.1} parent=11 // pred_check_branch
          %266 = sbr.rel (%p264) target = $region16
        $region15: #{tpu_custom_call.1} parent=11 // pred_region
          _
        $region16: #{tpu_custom_call.1} parent=11 // pred_fallthru
          _
        // Predicated region
        $region17: #{tpu_custom_call.1} parent=11 // pred_check
          %p267 = pneg %p118
        $region18: #{tpu_custom_call.1} parent=11 // pred_check_branch
          %269 = sbr.rel (%p267) target = $region20
        $region19: #{tpu_custom_call.1} parent=11 // pred_region
          _
        $region20: #{tpu_custom_call.1} parent=11 // pred_fallthru
          _
        // Predicated region
        $region21: #{tpu_custom_call.1} parent=11 // pred_check
          %p270 = pneg %p139
        $region22: #{tpu_custom_call.1} parent=11 // pred_check_branch
          %272 = sbr.rel (%p270) target = $region24
        $region23: #{tpu_custom_call.1} parent=11 // pred_region
          _
        $region24: #{tpu_custom_call.1} parent=11 // pred_fallthru
          _
        // Predicated region
        $region25: #{tpu_custom_call.1} parent=11 // pred_check
          %p273 = pneg %p160
        $region26: #{tpu_custom_call.1} parent=11 // pred_check_branch
          %275 = sbr.rel (%p273) target = $region28
        $region27: #{tpu_custom_call.1} parent=11 // pred_region
          _
        $region28: #{tpu_custom_call.1} parent=11 // pred_fallthru
          _
        // Predicated region
        $region29: #{tpu_custom_call.1} parent=11 // pred_check
          %p276 = pneg %p181
        $region30: #{tpu_custom_call.1} parent=11 // pred_check_branch
          %278 = sbr.rel (%p276) target = $region32
        $region31: #{tpu_custom_call.1} parent=11 // pred_region
          _
        $region32: #{tpu_custom_call.1} parent=11 // pred_fallthru
          _
        // Predicated region
        $region33: #{tpu_custom_call.1} parent=11 // pred_check
          %p279 = pneg %p202
        $region34: #{tpu_custom_call.1} parent=11 // pred_check_branch
          %281 = sbr.rel (%p279) target = $region36
        $region35: #{tpu_custom_call.1} parent=11 // pred_region
          _
        $region36: #{tpu_custom_call.1} parent=11 // pred_fallthru
          _
        // Predicated region
        $region37: #{tpu_custom_call.1} parent=11 // pred_check
          %p282 = pneg %p223
        $region38: #{tpu_custom_call.1} parent=11 // pred_check_branch
          %284 = sbr.rel (%p282) target = $region40
        $region39: #{tpu_custom_call.1} parent=11 // pred_region
          _
        $region40: #{tpu_custom_call.1} parent=11 // pred_fallthru
          _
      $region12: #{tpu_custom_call.1} parent=5 // pred_fallthru
        _
      %p285 = scmp.lt.s32.totalorder %s24, 2
      // Predicated region
      $region41: #{tpu_custom_call.1} parent=5 // pred_check
        %p286 = pneg %p285
      $region42: #{tpu_custom_call.1} parent=5 // pred_check_branch
        %288 = sbr.rel (%p286) target = $region44
      $region43: #{tpu_custom_call.1} parent=5 // pred_region
        // Predicated region
        $region45: #{tpu_custom_call.1} parent=43 // pred_check
          %p289 = pneg %p44
        $region46: #{tpu_custom_call.1} parent=43 // pred_check_branch
          %291 = sbr.rel (%p289) target = $region48
        $region47: #{tpu_custom_call.1} parent=43 // pred_region
          %s292 = sand.u32 %s34, 1
          %s293 = scalar_lea.sflag [#allocation3], %s292
          %s294 = sand.u32 %s34, 1
          %s295 = smul.addr %s294, 8
          %s296 = scalar_lea.vmem [#allocation2], %s295
          %s298 = ssub.s32 128, 128
          %299 = vsyncadd %s293, %s298
          %s300 = smul.addr %s24, 2
          %s301 = smul.addr %s300, 64
          %s302 = scalar_lea.hbm %s0, %s301
          %s304 = sshll.u32 %s296, 4
          %s305 = int_to_ptr.vmem [resolvable:$true] %s304
          %307 = dma.hbm_to_vmem [thread:$0]  %s302, 128, %s305, %s293
        $region48: #{tpu_custom_call.1} parent=43 // pred_fallthru
          _
        // Predicated region
        $region49: #{tpu_custom_call.1} parent=43 // pred_check
          %p308 = pneg %p70
        $region50: #{tpu_custom_call.1} parent=43 // pred_check_branch
          %310 = sbr.rel (%p308) target = $region52
        $region51: #{tpu_custom_call.1} parent=43 // pred_region
          %s311 = sand.u32 %s60, 1
          %s312 = scalar_lea.sflag [#allocation6], %s311
          %s313 = sand.u32 %s60, 1
          %s314 = smul.addr %s313, 8
          %s315 = scalar_lea.vmem [#allocation5], %s314
          %s317 = ssub.s32 128, 128
          %318 = vsyncadd %s312, %s317
          %s319 = smul.addr %s24, 2
          %s320 = smul.addr %s319, 64
          %s321 = scalar_lea.hbm %s1, %s320
          %s323 = sshll.u32 %s315, 4
          %s324 = int_to_ptr.vmem [resolvable:$true] %s323
          %326 = dma.hbm_to_vmem [thread:$0]  %s321, 128, %s324, %s312
        $region52: #{tpu_custom_call.1} parent=43 // pred_fallthru
          _
      $region44: #{tpu_custom_call.1} parent=5 // pred_fallthru
        _
      %p327 = scmp.le.s32.totalorder 1, %s24
      %p328 = scmp.lt.s32.totalorder %s24, 3
      %p329 = pnand %p327, %p328
      %p330 = pneg %p329
      // Predicated region
      $region53: #{tpu_custom_call.1} parent=5 // pred_check
        _
      $region54: #{tpu_custom_call.1} parent=5 // pred_check_branch
        %332 = sbr.rel (%p329) target = $region56
      $region55: #{tpu_custom_call.1} parent=5 // pred_region
        %s333 = ssub.s32 %s24, 1
        %s334 = sand.u32 %s37, 1
        %s335 = scalar_lea.sflag [#allocation3], %s334
        %s336 = sand.u32 %s37, 1
        %s337 = smul.addr %s336, 8
        %s338 = scalar_lea.vmem [#allocation2], %s337
        // Predicated region
        $region57: #{tpu_custom_call.1} parent=55 // pred_check
          %p339 = pneg %p50
        $region58: #{tpu_custom_call.1} parent=55 // pred_check_branch
          %341 = sbr.rel (%p339) target = $region60
        $region59: #{tpu_custom_call.1} parent=55 // pred_region
          %342 = dma.done %s335, 128
        $region60: #{tpu_custom_call.1} parent=55 // pred_fallthru
          _
        %s343 = sand.u32 %s63, 1
        %s344 = scalar_lea.sflag [#allocation6], %s343
        %s345 = sand.u32 %s63, 1
        %s346 = smul.addr %s345, 8
        %s347 = scalar_lea.vmem [#allocation5], %s346
        // Predicated region
        $region61: #{tpu_custom_call.1} parent=55 // pred_check
          %p348 = pneg %p76
        $region62: #{tpu_custom_call.1} parent=55 // pred_check_branch
          %350 = sbr.rel (%p348) target = $region64
        $region63: #{tpu_custom_call.1} parent=55 // pred_region
          %351 = dma.done %s344, 128
        $region64: #{tpu_custom_call.1} parent=55 // pred_fallthru
          _
        %s352 = sand.u32 %s37, 1
        %s353 = scalar_lea.sflag [#allocation3], %s352
        %s354 = sand.u32 %s37, 1
        %s355 = smul.addr %s354, 8
        %s356 = scalar_lea.vmem [#allocation2], %s355
        %p357 = pneg %p50
        %p358 = pneg %p47
        %s359 = sand.u32 %s63, 1
        %s360 = scalar_lea.sflag [#allocation6], %s359
        %s361 = sand.u32 %s63, 1
        %s362 = smul.addr %s361, 8
        %s363 = scalar_lea.vmem [#allocation5], %s362
        %p364 = pneg %p76
        %p365 = pneg %p73
        %p366 = pneg %p97
        %p367 = pneg %p94
        %p368 = pneg %p118
        %p369 = pneg %p115
        %p370 = pneg %p139
        %p371 = pneg %p136
        %p372 = pneg %p160
        %p373 = pneg %p157
        %p374 = pneg %p181
        %p375 = pneg %p178
        %p376 = pneg %p202
        %p377 = pneg %p199
        %p378 = pneg %p223
        %p379 = pneg %p220
        %p380 = pneg %p249
        %p381 = pneg %p246
        %s382 = sand.u32 %s236, 1
        %s383 = scalar_lea.sflag [#allocation4], %s382
        %s384 = sand.u32 %s236, 1
        %s385 = smul.addr %s384, 16
        %s386 = scalar_lea.vmem [#allocation7], %s385
        %v387 = vld [vmem:[%s2] sm:$0xf]
        %v388 = vld [vmem:[%s347] sm:$0xff]
        %390 = vset.pattern.permute.xlu0 0
        %391 = vperm.xlu0 %390, %v387
        %v392 = vpop.permute.xlu0 %391
        %v395 = vlaneseq
        %v396 = vshrl.u32 %v395, 7
        %v397 = vsub.s32 0, %v396
        %v398 = vrot.slane %v388, %v397
        %v399 = vlaneseq
        %v400 = vshrl.u32 %v399, 7
        %v401 = vsub.s32 4, %v400
        %v402 = vrot.slane %v388, %v401
        %v405 = vlaneseq
        %v406 = vshrl.u32 %v405, 7
        %v407 = vsub.s32 0, %v406
        %v408 = vrot.slane %v398, %v407
        %v409 = vlaneseq
        %v410 = vshrl.u32 %v409, 7
        %v411 = vsub.s32 0, %v410
        %v412 = vrot.slane %v402, %v411
        %v413 = vmul.f32 %v392, %v408
        %v414 = vmul.f32 %v392, %v412
        %415 = vset.pattern.permute.xlu0 1
        %416 = vperm.xlu0 %415, %v387
        %v417 = vpop.permute.xlu0 %416
        %v419 = vlaneseq
        %v420 = vshrl.u32 %v419, 7
        %v421 = vsub.s32 1, %v420
        %v422 = vrot.slane %v388, %v421
        %v423 = vlaneseq
        %v424 = vshrl.u32 %v423, 7
        %v425 = vsub.s32 5, %v424
        %v426 = vrot.slane %v388, %v425
        %v429 = vlaneseq
        %v430 = vshrl.u32 %v429, 7
        %v431 = vsub.s32 1, %v430
        %v432 = vrot.slane %v422, %v431
        %v433 = vlaneseq
        %v434 = vshrl.u32 %v433, 7
        %v435 = vsub.s32 1, %v434
        %v436 = vrot.slane %v426, %v435
        %v437 = vmul.f32 %v417, %v432
        %v438 = vmul.f32 %v417, %v436
        %v439 = vadd.f32 %v413, %v437
        %v440 = vadd.f32 %v414, %v438
        %441 = vset.pattern.permute.xlu0 2
        %442 = vperm.xlu0 %441, %v387
        %v443 = vpop.permute.xlu0 %442
        %v445 = vlaneseq
        %v446 = vshrl.u32 %v445, 7
        %v447 = vsub.s32 2, %v446
        %v448 = vrot.slane %v388, %v447
        %v449 = vlaneseq
        %v450 = vshrl.u32 %v449, 7
        %v451 = vsub.s32 6, %v450
        %v452 = vrot.slane %v388, %v451
        %v455 = vlaneseq
        %v456 = vshrl.u32 %v455, 7
        %v457 = vsub.s32 2, %v456
        %v458 = vrot.slane %v448, %v457
        %v459 = vlaneseq
        %v460 = vshrl.u32 %v459, 7
        %v461 = vsub.s32 2, %v460
        %v462 = vrot.slane %v452, %v461
        %v463 = vmul.f32 %v443, %v458
        %v464 = vmul.f32 %v443, %v462
        %v465 = vadd.f32 %v439, %v463
        %v466 = vadd.f32 %v440, %v464
        %467 = vset.pattern.permute.xlu0 3
        %468 = vperm.xlu0 %467, %v387
        %v469 = vpop.permute.xlu0 %468
        %v471 = vlaneseq
        %v472 = vshrl.u32 %v471, 7
        %v473 = vsub.s32 3, %v472
        %v474 = vrot.slane %v388, %v473
        %v475 = vlaneseq
        %v476 = vshrl.u32 %v475, 7
        %v477 = vsub.s32 7, %v476
        %v478 = vrot.slane %v388, %v477
        %v481 = vlaneseq
        %v482 = vshrl.u32 %v481, 7
        %v483 = vsub.s32 3, %v482
        %v484 = vrot.slane %v474, %v483
        %v485 = vlaneseq
        %v486 = vshrl.u32 %v485, 7
        %v487 = vsub.s32 3, %v486
        %v488 = vrot.slane %v478, %v487
        %v489 = vmul.f32 %v469, %v484
        %v490 = vmul.f32 %v469, %v488
        %v491 = vadd.f32 %v465, %v489
        %v492 = vadd.f32 %v466, %v490
        %v493 = vld [vmem:[%s3] sm:$0xf]
        %495 = vset.pattern.permute.xlu0 0
        %496 = vperm.xlu0 %495, %v493
        %v497 = vpop.permute.xlu0 %496
        %v499 = vadd.f32 %v491, %v497
        %v500 = vadd.f32 %v492, %v497
        %v501 = vadd.f32 %v499, 3.0
        %v502 = vadd.f32 %v500, 3.0
        %v503 = vmax.f32 %v501, 0.0
        %v504 = vmax.f32 %v502, 0.0
        %v505 = vmin.f32 %v503, 6.0
        %v506 = vmin.f32 %v504, 6.0
        %v507 = vmul.f32 %v499, %v505
        %v508 = vmul.f32 %v500, %v506
        %v509 = vmul.f32 %v507, 0.16666667
        %v510 = vmul.f32 %v508, 0.16666667
        %v511 = vld [vmem:[%s4] sm:$0xf]
        %513 = vset.pattern.permute.xlu0 4
        %514 = vperm.xlu0 %513, %v511
        %v515 = vpop.permute.xlu0 %514
        %v517 = vmul.f32 %v509, %v515
        %v518 = vmul.f32 %v510, %v515
        %519 = vrot.lane.b32.xlu0 %v509, 17
        %v520 = vpop.permute.xlu0 %519
        %521 = vrot.lane.b32.xlu0 %v510, 17
        %v522 = vpop.permute.xlu0 %521
        %v523 = vlaneseq
        %v524 = vand.u32 %v523, 127
        %vm525 = vcmp.lt.s32.totalorder %v524, 17
        %v526 = vsel %vm525, %v520, %v522
        %v527 = vsel %vm525, %v522, %v520
        %v528 = vld [vmem:[%s8] ss:$8 sm:$0x3]
        %v530 = vlaneseq
        %v531 = vshrl.u32 %v530, 7
        %v532 = vsub.s32 0, %v531
        %v533 = vrot.slane %v528, %v532
        %v534 = vlaneseq
        %v535 = vshrl.u32 %v534, 7
        %v536 = vsub.s32 1, %v535
        %v537 = vrot.slane %v528, %v536
        %v540 = vmul.f32 %v527, %v533
        %v541 = vmul.f32 %v526, %v537
        %542 = vset.pattern.permute.xlu0 0
        %543 = vperm.xlu0 %542, %v511
        %v544 = vpop.permute.xlu0 %543
        %v546 = vmul.f32 %v540, %v544
        %v547 = vmul.f32 %v541, %v544
        %v548 = vadd.f32 %v517, %v546
        %v549 = vadd.f32 %v518, %v547
        %550 = vrot.lane.b32.xlu0 %v509, 16
        %v551 = vpop.permute.xlu0 %550
        %552 = vrot.lane.b32.xlu0 %v510, 16
        %v553 = vpop.permute.xlu0 %552
        %vm554 = vcmp.lt.s32.totalorder %v524, 16
        %v555 = vsel %vm554, %v551, %v553
        %v556 = vsel %vm554, %v553, %v551
        %s557 = scalar_lea.vmem %s8, 1
        %v558 = vld [vmem:[%s557] ss:$8 sm:$0x3]
        %v560 = vlaneseq
        %v561 = vshrl.u32 %v560, 7
        %v562 = vsub.s32 0, %v561
        %v563 = vrot.slane %v558, %v562
        %v564 = vlaneseq
        %v565 = vshrl.u32 %v564, 7
        %v566 = vsub.s32 1, %v565
        %v567 = vrot.slane %v558, %v566
        %v570 = vmul.f32 %v556, %v563
        %v571 = vmul.f32 %v555, %v567
        %572 = vset.pattern.permute.xlu0 1
        %573 = vperm.xlu0 %572, %v511
        %v574 = vpop.permute.xlu0 %573
        %v576 = vmul.f32 %v570, %v574
        %v577 = vmul.f32 %v571, %v574
        %v578 = vadd.f32 %v548, %v576
        %v579 = vadd.f32 %v549, %v577
        %580 = vrot.lane.b32.xlu0 %v509, 15
        %v581 = vpop.permute.xlu0 %580
        %582 = vrot.lane.b32.xlu0 %v510, 15
        %v583 = vpop.permute.xlu0 %582
        %vm584 = vcmp.lt.s32.totalorder %v524, 15
        %v585 = vsel %vm584, %v581, %v583
        %v586 = vsel %vm584, %v583, %v581
        %s587 = scalar_lea.vmem %s8, 2
        %v588 = vld [vmem:[%s587] ss:$8 sm:$0x3]
        %v590 = vlaneseq
        %v591 = vshrl.u32 %v590, 7
        %v592 = vsub.s32 0, %v591
        %v593 = vrot.slane %v588, %v592
        %v594 = vlaneseq
        %v595 = vshrl.u32 %v594, 7
        %v596 = vsub.s32 1, %v595
        %v597 = vrot.slane %v588, %v596
        %v600 = vmul.f32 %v586, %v593
        %v601 = vmul.f32 %v585, %v597
        %602 = vset.pattern.permute.xlu0 2
        %603 = vperm.xlu0 %602, %v511
        %v604 = vpop.permute.xlu0 %603
        %v606 = vmul.f32 %v600, %v604
        %v607 = vmul.f32 %v601, %v604
        %v608 = vadd.f32 %v578, %v606
        %v609 = vadd.f32 %v579, %v607
        %610 = vrot.lane.b32.xlu0 %v509, 1
        %v611 = vpop.permute.xlu0 %610
        %612 = vrot.lane.b32.xlu0 %v510, 1
        %v613 = vpop.permute.xlu0 %612
        %vm614 = vcmp.lt.s32.totalorder %v524, 1
        %v615 = vsel %vm614, %v611, %v613
        %v616 = vsel %vm614, %v613, %v611
        %s617 = scalar_lea.vmem %s8, 3
        %v618 = vld [vmem:[%s617] ss:$8 sm:$0x3]
        %v620 = vlaneseq
        %v621 = vshrl.u32 %v620, 7
        %v622 = vsub.s32 0, %v621
        %v623 = vrot.slane %v618, %v622
        %v624 = vlaneseq
        %v625 = vshrl.u32 %v624, 7
        %v626 = vsub.s32 1, %v625
        %v627 = vrot.slane %v618, %v626
        %v630 = vmul.f32 %v616, %v623
        %v631 = vmul.f32 %v615, %v627
        %632 = vset.pattern.permute.xlu0 3
        %633 = vperm.xlu0 %632, %v511
        %v634 = vpop.permute.xlu0 %633
        %v636 = vmul.f32 %v630, %v634
        %v637 = vmul.f32 %v631, %v634
        %v638 = vadd.f32 %v608, %v636
        %v639 = vadd.f32 %v609, %v637
        %640 = vrot.lane.b32.xlu0 %v509, 127
        %v641 = vpop.permute.xlu0 %640
        %642 = vrot.lane.b32.xlu0 %v510, 127
        %v643 = vpop.permute.xlu0 %642
        %vm644 = vcmp.lt.s32.totalorder %v524, 127
        %v645 = vsel %vm644, %v641, %v643
        %v646 = vsel %vm644, %v643, %v641
        %s647 = scalar_lea.vmem %s8, 5
        %v648 = vld [vmem:[%s647] ss:$8 sm:$0x3]
        %v650 = vlaneseq
        %v651 = vshrl.u32 %v650, 7
        %v652 = vsub.s32 0, %v651
        %v653 = vrot.slane %v648, %v652
        %v654 = vlaneseq
        %v655 = vshrl.u32 %v654, 7
        %v656 = vsub.s32 1, %v655
        %v657 = vrot.slane %v648, %v656
        %v660 = vmul.f32 %v645, %v653
        %v661 = vmul.f32 %v646, %v657
        %662 = vset.pattern.permute.xlu0 5
        %663 = vperm.xlu0 %662, %v511
        %v664 = vpop.permute.xlu0 %663
        %v666 = vmul.f32 %v660, %v664
        %v667 = vmul.f32 %v661, %v664
        %v668 = vadd.f32 %v638, %v666
        %v669 = vadd.f32 %v639, %v667
        %670 = vrot.lane.b32.xlu0 %v509, 113
        %v671 = vpop.permute.xlu0 %670
        %672 = vrot.lane.b32.xlu0 %v510, 113
        %v673 = vpop.permute.xlu0 %672
        %vm674 = vcmp.lt.s32.totalorder %v524, 113
        %v675 = vsel %vm674, %v671, %v673
        %v676 = vsel %vm674, %v673, %v671
        %s677 = scalar_lea.vmem %s8, 6
        %v678 = vld [vmem:[%s677] ss:$8 sm:$0x3]
        %v680 = vlaneseq
        %v681 = vshrl.u32 %v680, 7
        %v682 = vsub.s32 0, %v681
        %v683 = vrot.slane %v678, %v682
        %v684 = vlaneseq
        %v685 = vshrl.u32 %v684, 7
        %v686 = vsub.s32 1, %v685
        %v687 = vrot.slane %v678, %v686
        %v690 = vmul.f32 %v675, %v683
        %v691 = vmul.f32 %v676, %v687
        %692 = vset.pattern.permute.xlu0 6
        %693 = vperm.xlu0 %692, %v511
        %v694 = vpop.permute.xlu0 %693
        %v696 = vmul.f32 %v690, %v694
        %v697 = vmul.f32 %v691, %v694
        %v698 = vadd.f32 %v668, %v696
        %v699 = vadd.f32 %v669, %v697
        %700 = vrot.lane.b32.xlu0 %v509, 112
        %v701 = vpop.permute.xlu0 %700
        %702 = vrot.lane.b32.xlu0 %v510, 112
        %v703 = vpop.permute.xlu0 %702
        %vm704 = vcmp.lt.s32.totalorder %v524, 112
        %v705 = vsel %vm704, %v701, %v703
        %v706 = vsel %vm704, %v703, %v701
        %s707 = scalar_lea.vmem %s8, 7
        %v708 = vld [vmem:[%s707] ss:$8 sm:$0x3]
        %v710 = vlaneseq
        %v711 = vshrl.u32 %v710, 7
        %v712 = vsub.s32 0, %v711
        %v713 = vrot.slane %v708, %v712
        %v714 = vlaneseq
        %v715 = vshrl.u32 %v714, 7
        %v716 = vsub.s32 1, %v715
        %v717 = vrot.slane %v708, %v716
        %v720 = vmul.f32 %v705, %v713
        %v721 = vmul.f32 %v706, %v717
        %722 = vset.pattern.permute.xlu0 7
        %723 = vperm.xlu0 %722, %v511
        %v724 = vpop.permute.xlu0 %723
        %v726 = vmul.f32 %v720, %v724
        %v727 = vmul.f32 %v721, %v724
        %v728 = vadd.f32 %v698, %v726
        %v729 = vadd.f32 %v699, %v727
        %730 = vrot.lane.b32.xlu0 %v509, 111
        %v731 = vpop.permute.xlu0 %730
        %732 = vrot.lane.b32.xlu0 %v510, 111
        %v733 = vpop.permute.xlu0 %732
        %vm734 = vcmp.lt.s32.totalorder %v524, 111
        %v735 = vsel %vm734, %v731, %v733
        %v736 = vsel %vm734, %v733, %v731
        %s737 = scalar_lea.vmem %s8, 16
        %v738 = vld [vmem:[%s737] ss:$8 sm:$0x3]
        %v740 = vlaneseq
        %v741 = vshrl.u32 %v740, 7
        %v742 = vsub.s32 0, %v741
        %v743 = vrot.slane %v738, %v742
        %v744 = vlaneseq
        %v745 = vshrl.u32 %v744, 7
        %v746 = vsub.s32 1, %v745
        %v747 = vrot.slane %v738, %v746
        %v750 = vmul.f32 %v735, %v743
        %v751 = vmul.f32 %v736, %v747
        %752 = vset.pattern.permute.xlu0 8
        %753 = vperm.xlu0 %752, %v511
        %v754 = vpop.permute.xlu0 %753
        %v756 = vmul.f32 %v750, %v754
        %v757 = vmul.f32 %v751, %v754
        %v758 = vadd.f32 %v728, %v756
        %v759 = vadd.f32 %v729, %v757
        %v760 = vld [vmem:[%s5] sm:$0xf]
        %762 = vset.pattern.permute.xlu0 0
        %763 = vperm.xlu0 %762, %v760
        %v764 = vpop.permute.xlu0 %763
        %v766 = vadd.f32 %v758, %v764
        %v767 = vadd.f32 %v759, %v764
        %v768 = vld [vmem:[%s6] sm:$0xf]
        %770 = vset.pattern.permute.xlu0 0
        %771 = vperm.xlu0 %770, %v768
        %v772 = vpop.permute.xlu0 %771
        %v774 = vlaneseq
        %v775 = vshrl.u32 %v774, 7
        %v776 = vsub.s32 0, %v775
        %v777 = vrot.slane %v766, %v776
        %v778 = vlaneseq
        %v779 = vshrl.u32 %v778, 7
        %v780 = vsub.s32 0, %v779
        %v781 = vrot.slane %v767, %v780
        %v782 = vmul.f32 %v772, %v777
        %v783 = vmul.f32 %v772, %v781
        %784 = vset.pattern.permute.xlu0 1
        %785 = vperm.xlu0 %784, %v768
        %v786 = vpop.permute.xlu0 %785
        %v788 = vlaneseq
        %v789 = vshrl.u32 %v788, 7
        %v790 = vsub.s32 1, %v789
        %v791 = vrot.slane %v766, %v790
        %v792 = vlaneseq
        %v793 = vshrl.u32 %v792, 7
        %v794 = vsub.s32 1, %v793
        %v795 = vrot.slane %v767, %v794
        %v796 = vmul.f32 %v786, %v791
        %v797 = vmul.f32 %v786, %v795
        %v798 = vadd.f32 %v782, %v796
        %v799 = vadd.f32 %v783, %v797
        %800 = vset.pattern.permute.xlu0 2
        %801 = vperm.xlu0 %800, %v768
        %v802 = vpop.permute.xlu0 %801
        %v804 = vlaneseq
        %v805 = vshrl.u32 %v804, 7
        %v806 = vsub.s32 2, %v805
        %v807 = vrot.slane %v766, %v806
        %v808 = vlaneseq
        %v809 = vshrl.u32 %v808, 7
        %v810 = vsub.s32 2, %v809
        %v811 = vrot.slane %v767, %v810
        %v812 = vmul.f32 %v802, %v807
        %v813 = vmul.f32 %v802, %v811
        %v814 = vadd.f32 %v798, %v812
        %v815 = vadd.f32 %v799, %v813
        %816 = vset.pattern.permute.xlu0 3
        %817 = vperm.xlu0 %816, %v768
        %v818 = vpop.permute.xlu0 %817
        %v820 = vlaneseq
        %v821 = vshrl.u32 %v820, 7
        %v822 = vsub.s32 3, %v821
        %v823 = vrot.slane %v766, %v822
        %v824 = vlaneseq
        %v825 = vshrl.u32 %v824, 7
        %v826 = vsub.s32 3, %v825
        %v827 = vrot.slane %v767, %v826
        %v828 = vmul.f32 %v818, %v823
        %v829 = vmul.f32 %v818, %v827
        %v830 = vadd.f32 %v814, %v828
        %v831 = vadd.f32 %v815, %v829
        %v832 = vld [vmem:[%s7] sm:$0xf]
        %834 = vset.pattern.permute.xlu0 0
        %835 = vperm.xlu0 %834, %v832
        %v836 = vpop.permute.xlu0 %835
        %v838 = vadd.f32 %v830, %v836
        %v839 = vadd.f32 %v831, %v836
        %v840 = vadd.f32 %v838, 3.0
        %v841 = vadd.f32 %v839, 3.0
        %v842 = vmax.f32 %v840, 0.0
        %v843 = vmax.f32 %v841, 0.0
        %v844 = vmin.f32 %v842, 6.0
        %v845 = vmin.f32 %v843, 6.0
        %v846 = vmul.f32 %v838, %v844
        %v847 = vmul.f32 %v839, %v845
        %v848 = vmul.f32 %v846, 0.16666667
        %v849 = vmul.f32 %v847, 0.16666667
        %v850 = vld [vmem:[%s338] sm:$0xff]
        %v852 = vlaneseq
        %v853 = vshrl.u32 %v852, 7
        %v854 = vsub.s32 0, %v853
        %v855 = vrot.slane %v850, %v854
        %v856 = vlaneseq
        %v857 = vshrl.u32 %v856, 7
        %v858 = vsub.s32 4, %v857
        %v859 = vrot.slane %v850, %v858
        %v864 = vrot.slane %v848, 7
        %v865 = vrot.slane %v849, 7
        %v868 = vlaneseq
        %v869 = vshrl.u32 %v868, 7
        %v870 = vsub.s32 1, %v869
        %v871 = vrot.slane %v850, %v870
        %v872 = vlaneseq
        %v873 = vshrl.u32 %v872, 7
        %v874 = vsub.s32 5, %v873
        %v875 = vrot.slane %v850, %v874
        %v878 = vrot.slane %v848, 6
        %v879 = vrot.slane %v849, 6
        %v882 = vlaneseq
        %v883 = vshrl.u32 %v882, 7
        %v884 = vsub.s32 2, %v883
        %v885 = vrot.slane %v850, %v884
        %v886 = vlaneseq
        %v887 = vshrl.u32 %v886, 7
        %v888 = vsub.s32 6, %v887
        %v889 = vrot.slane %v850, %v888
        %v892 = vrot.slane %v848, 5
        %v893 = vrot.slane %v849, 5
        %v896 = vlaneseq
        %v897 = vshrl.u32 %v896, 7
        %v898 = vsub.s32 3, %v897
        %v899 = vrot.slane %v850, %v898
        %v900 = vlaneseq
        %v901 = vshrl.u32 %v900, 7
        %v902 = vsub.s32 7, %v901
        %v903 = vrot.slane %v850, %v902
        %v906 = vrot.slane %v848, 4
        %v907 = vrot.slane %v849, 4
        %vm910 = vcmask 1040384
        %v911 = vsel %vm910, %v855, %v864
        %v912 = vsel %vm910, %v859, %v865
        %vm913 = vcmask 1041408
        %v914 = vsel %vm913, %v911, %v871
        %v915 = vsel %vm913, %v912, %v875
        %vm916 = vcmask 1042432
        %v917 = vsel %vm916, %v914, %v878
        %v918 = vsel %vm916, %v915, %v879
        %vm919 = vcmask 1043456
        %v920 = vsel %vm919, %v917, %v885
        %v921 = vsel %vm919, %v918, %v889
        %vm922 = vcmask 1044480
        %v923 = vsel %vm922, %v920, %v892
        %v924 = vsel %vm922, %v921, %v893
        %vm925 = vcmask 1045504
        %v926 = vsel %vm925, %v923, %v899
        %v927 = vsel %vm925, %v924, %v903
        %vm928 = vcmask 1046528
        %v929 = vsel %vm928, %v926, %v906
        %v930 = vsel %vm928, %v927, %v907
        %931 = vst [vmem:[%s386] sm:$0xff] %v929
        %932 = vst [vmem:[%s386 + $0x8] sm:$0xff] %v930
        %s933 = sand.u32 %s236, 1
        %s934 = scalar_lea.sflag [#allocation4], %s933
        %s935 = sand.u32 %s236, 1
        %s936 = smul.addr %s935, 16
        %s937 = scalar_lea.vmem [#allocation7], %s936
        // Predicated region
        $region65: #{tpu_custom_call.1} parent=55 // pred_check
          %p938 = pneg %p246
        $region66: #{tpu_custom_call.1} parent=55 // pred_check_branch
          %940 = sbr.rel (%p938) target = $region68
        $region67: #{tpu_custom_call.1} parent=55 // pred_region
          %s942 = ssub.s32 256, 256
          %943 = vsyncadd %s934, %s942
          %s944 = smul.addr %s29, 2
          %s945 = smul.addr %s944, 128
          %s946 = scalar_lea.hbm %s9, %s945
          %s948 = sshll.u32 %s937, 4
          %s949 = int_to_ptr.vmem [resolvable:$true] %s948
          %951 = dma.vmem_to_hbm [thread:$0]  %s949, 256, %s946, %s934
        $region68: #{tpu_custom_call.1} parent=55 // pred_fallthru
          _
      $region56: #{tpu_custom_call.1} parent=5 // pred_fallthru
        _
      %p952 = scmp.le.s32.totalorder 2, %s24
      // Predicated region
      $region69: #{tpu_custom_call.1} parent=5 // pred_check
        %p953 = pneg %p952
      $region70: #{tpu_custom_call.1} parent=5 // pred_check_branch
        %955 = sbr.rel (%p953) target = $region72
      $region71: #{tpu_custom_call.1} parent=5 // pred_region
        %s956 = ssub.s32 %s24, 2
        // Predicated region
        $region73: #{tpu_custom_call.1} parent=71 // pred_check
          %p957 = pneg %p252
        $region74: #{tpu_custom_call.1} parent=71 // pred_check_branch
          %959 = sbr.rel (%p957) target = $region76
        $region75: #{tpu_custom_call.1} parent=71 // pred_region
          %s960 = sand.u32 %s237, 1
          %s961 = scalar_lea.sflag [#allocation4], %s960
          %s962 = sand.u32 %s237, 1
          %s963 = smul.addr %s962, 16
          %s964 = scalar_lea.vmem [#allocation7], %s963
          %965 = dma.done %s961, 256
        $region76: #{tpu_custom_call.1} parent=71 // pred_fallthru
          _
      $region72: #{tpu_custom_call.1} parent=5 // pred_fallthru
        _
    $region6: #{tpu_custom_call.1} parent=1 // loop_footer
      %s28 = sadd.s32 1, %s24
    $region7: #{tpu_custom_call.1} parent=1 // loop_footer_branch
      %23 = sbr.rel target = $region3
    $region8: #{tpu_custom_call.1} parent=1 // loop_exit
      _
    %966 = vsyncpa [#allocation3], 1
    %s967 = scalar_lea.sflag [#allocation3], 1
    %968 = vsyncpa %s967, 1
    %969 = vsyncpa [#allocation6], 1
    %s970 = scalar_lea.sflag [#allocation6], 1
    %971 = vsyncpa %s970, 1
    %972 = vsyncpa [#allocation4], 1
    %s973 = scalar_lea.sflag [#allocation4], 1
    %974 = vsyncpa %s973, 1

</llo_original>
